<compile_context>
chip_gen: v7x
topology: tpu7x:2x2x1
jax: 0.10.0
libtpu: 0.0.40
codegen_flags: <defaults>
</compile_context>

<pallas_src>
import math
import jax
import jax.numpy as jnp
from jax import lax
from jax.experimental import pallas as pl
from jax.experimental.pallas import tpu as pltpu


def _vmem_capacity_bytes():
    try:
        return int(pltpu.get_tpu_info().vmem_capacity_bytes)
    except Exception:
        return 128 << 20   # v5e/v6e default; conservative fallback


# ----------------------------- linear kernel --------------------------------
def _linear_kernel(x_ref, w_ref, b_ref, o_ref):
    # y = x @ W^T + b   (W^T is passed in pre-transposed as (in, out))
    acc = jnp.dot(x_ref[...], w_ref[...], preferred_element_type=jnp.float32)
    o_ref[...] = (acc + b_ref[...]).astype(o_ref.dtype)


def linear(x, w_t, b, tl=None):
    B, L, Din = x.shape
    Dout = w_t.shape[1]
    if tl is None:
        # full rows for short sequences, otherwise 256-row tiles (multiple of 8)
        tl = L if L <= 512 else 256
    return pl.pallas_call(
        _linear_kernel,
        out_shape=jax.ShapeDtypeStruct((B, L, Dout), x.dtype),
        grid_spec=pltpu.PrefetchScalarGridSpec(
            num_scalar_prefetch=0,
            grid=(B, pl.cdiv(L, tl)),
            in_specs=[
                pl.BlockSpec((None, tl, Din), lambda b, l: (b, l, 0)),
                pl.BlockSpec((Din, Dout), lambda b, l: (0, 0)),
                pl.BlockSpec((1, Dout), lambda b, l: (0, 0)),
            ],
            out_specs=pl.BlockSpec((None, tl, Dout), lambda b, l: (b, l, 0)),
        ),
        compiler_params=pltpu.CompilerParams(
            dimension_semantics=("parallel", "parallel")
        ),
    )(x, w_t, b.reshape(1, Dout))


# ------------------ prob-sparse attention + output projection ----------------
def _make_attn_kernel(n_heads, d_k, topk, n_bisect):
    # All closure constants are plain Python numbers (no captured jnp arrays).
    topk = int(topk)
    n_bisect = int(n_bisect)

    def kernel(q_ref, k_ref, v_ref, wo_ref, bo_ref, o_ref):
        # q_ref: (TQ, D), k/v_ref: (Lk, D), wo_ref: (D, D), bo_ref: (1, D)
        q_all = q_ref[...]                  # softmax scale pre-folded into W_q
        k_all = k_ref[...]
        v_all = v_ref[...]
        wo = wo_ref[...]
        tq = q_all.shape[0]

        # Pass 1: all per-head score tiles + hoisted exp tiles, so MXU / EUP
        # work overlaps the VPU/XLU bisection below.
        scores_l, e_l, rmax_l = [], [], []
        for h in range(n_heads):            # static, small head count
            sl = slice(h * d_k, (h + 1) * d_k)
            # scores = qh @ kh^T without materializing a transpose of K.
            s = lax.dot_general(
                q_all[:, sl], k_all[:, sl], (((1,), (1,)), ((), ())),
                preferred_element_type=jnp.float32)            # (TQ, Lk) f32
            m = jnp.max(s, axis=-1, keepdims=True)
            scores_l.append(s)
            rmax_l.append(m)
            e_l.append(jnp.exp(s - m))       # hoisted above the bisection

        # Single bisection over all heads: stack rows on the sublane axis.
        scores = jnp.concatenate(scores_l, axis=0)             # (H*TQ, Lk)
        hi0 = jnp.concatenate(rmax_l, axis=0)                  # (H*TQ, 1)
        lo0 = jnp.min(scores, axis=-1, keepdims=True)

        # Binary search for the per-row k-th largest score; invariant
        # count(scores >= lo) >= topk.  After n_bisect halvings the threshold
        # error is (row range) * 2^-n_bisect, only perturbing near-ties.
        def bisect(_, carry):
            lo, hi = carry
            mid = 0.5 * (lo + hi)
            cnt = jnp.sum((scores >= mid).astype(jnp.int32),
                          axis=-1, keepdims=True)
            ge = cnt >= topk
            return jnp.where(ge, mid, lo), jnp.where(ge, hi, mid)

        lo, _ = lax.fori_loop(0, n_bisect, bisect, (lo0, hi0))

        # Pass 2: masked softmax, PV matmul, fused output projection.
        acc = jnp.zeros((tq, wo.shape[1]), jnp.float32)
        for h in range(n_heads):
            sl = slice(h * d_k, (h + 1) * d_k)
            lo_h = lo[h * tq:(h + 1) * tq, :]
            p = jnp.where(scores_l[h] >= lo_h, e_l[h], 0.0)
            denom = jnp.sum(p, axis=-1, keepdims=True)
            attn = p / denom                 # exact reciprocal (accuracy)
            ctx = jnp.dot(attn.astype(v_all.dtype), v_all[:, sl],
                          preferred_element_type=jnp.float32)   # (TQ, d_k)
            acc = acc + jnp.dot(ctx.astype(wo.dtype), wo[sl, :],
                                preferred_element_type=jnp.float32)

        # one lane-dense (TQ, d_model) store
        o_ref[...] = (acc + bo_ref[...]).astype(o_ref.dtype)

    return kernel


def sparse_attention(Qp, Kp, Vp, w_out_t, b_out, n_heads, topk,
                     tq=None, n_bisect=20):
    B, Lq, D = Qp.shape
    Lk = Kp.shape[1]
    d_k = D // n_heads
    itemsize = jnp.dtype(Qp.dtype).itemsize

    vmem_cap = _vmem_capacity_bytes()
    small_vmem = vmem_cap <= (64 << 20)      # v7x-class parts

    if tq is None:
        if Lq <= 256:
            tq = Lq
        else:
            tq = 128 if small_vmem else 256
        # bound the f32 bisection/softmax working set (~4 live (TQ,Lk) tiles/head)
        budget = (8 << 20) if small_vmem else (24 << 20)
        while tq > 64 and 4 * n_heads * tq * Lk * 4 > budget:
            tq //= 2
        # keep >= 2 parallel grid steps so 2-TC chips use both cores
        if B * pl.cdiv(Lq, tq) < 2 and Lq >= 16:
            tq = max(8, -(-(Lq // 2) // 8) * 8)

    # VMEM estimate: double-buffered blocks + f32 temporaries + Mosaic scratch.
    blocks = 2 * (2 * tq * D + 2 * Lk * D + D * D + D) * itemsize
    temps = (4 * n_heads + 6) * tq * Lk * 4
    est = blocks + temps + (2 << 20)
    cap = int(0.85 * vmem_cap)
    vmem_limit = None if est <= (16 << 20) else min(int(est * 1.25), cap)

    return pl.pallas_call(
        _make_attn_kernel(n_heads, d_k, topk, n_bisect),
        out_shape=jax.ShapeDtypeStruct((B, Lq, D), Qp.dtype),
        grid_spec=pltpu.PrefetchScalarGridSpec(
            num_scalar_prefetch=0,
            grid=(B, pl.cdiv(Lq, tq)),
            in_specs=[
                pl.BlockSpec((None, tq, D), lambda b, i: (b, i, 0)),
                pl.BlockSpec((None, Lk, D), lambda b, i: (b, 0, 0)),
                pl.BlockSpec((None, Lk, D), lambda b, i: (b, 0, 0)),
                pl.BlockSpec((D, D), lambda b, i: (0, 0)),
                pl.BlockSpec((1, D), lambda b, i: (0, 0)),
            ],
            out_specs=pl.BlockSpec((None, tq, D), lambda b, i: (b, i, 0)),
        ),
        compiler_params=pltpu.CompilerParams(
            dimension_semantics=("parallel", "parallel"),
            vmem_limit_bytes=vmem_limit,
        ),
    )(Qp, Kp, Vp, w_out_t, b_out.reshape(1, D))


# ------------------------------- full module ---------------------------------
def prob_sparse_attention(params, q, k, v, n_heads, topk_factor=0.5,
                          tq=None, n_bisect=20):
    bs, len_q, d_model = q.shape
    len_k = k.shape[1]
    d_k = d_model // n_heads
    scale = 1.0 / math.sqrt(d_k)
    topk = max(1, int(topk_factor * len_k))

    # fold the softmax scale into the Q projection (one-time parameter prep);
    # projections stay in (B, L, d_model) layout, head split happens in-kernel.
    wq_t, bq = params["q"]
    Qp = linear(q, wq_t * scale, bq * scale)
    Kp = linear(k, *params["k"])
    Vp = linear(v, *params["v"])

    w_out_t, b_out = params["out"]
    # attention + output projection fused in a single kernel
    return sparse_attention(Qp, Kp, Vp, w_out_t, b_out, n_heads, topk,
                            tq=tq, n_bisect=n_bisect)


# ------------------------------ plain-JAX ref ---------------------------------
def reference(params, q, k, v, n_heads, topk_factor=0.5):
    bs, len_q, d_model = q.shape
    len_k = k.shape[1]
    d_k = d_model // n_heads
    topk = max(1, int(topk_factor * len_k))

    def lin(x, p):
        return x @ p[0] + p[1]

    Q = lin(q, params["q"]).reshape(bs, len_q, n_heads, d_k).transpose(0, 2, 1, 3)
    K = lin(k, params["k"]).reshape(bs, len_k, n_heads, d_k).transpose(0, 2, 1, 3)
    V = lin(v, params["v"]).reshape(bs, len_k, n_heads, d_k).transpose(0, 2, 1, 3)
    scores = jnp.einsum("bhqd,bhkd->bhqk", Q, K) / math.sqrt(d_k)
    thresh = jnp.sort(scores, axis=-1)[..., len_k - topk][..., None]
    keep = scores >= thresh
    row_max = jnp.max(scores, axis=-1, keepdims=True)
    p = jnp.where(keep, jnp.exp(scores - row_max), 0.0)
    attn = p / jnp.sum(p, axis=-1, keepdims=True)
    ctx = jnp.einsum("bhqk,bhkd->bhqd", attn, V)
    ctx = ctx.transpose(0, 2, 1, 3).reshape(bs, len_q, n_heads * d_k)
    return lin(ctx, params["out"])


# ---------------------------------- main --------------------------------------
if __name__ == "__main__":
    d_model, n_heads, bs, seq = 32, 4, 2, 8
    key = jax.random.PRNGKey(0)
    keys = jax.random.split(key, 11)

    def init_linear(kw, kb, din, dout):
        bound = 1.0 / math.sqrt(din)
        w_t = jax.random.uniform(kw, (din, dout), jnp.float32, -bound, bound)
        b = jax.random.uniform(kb, (dout,), jnp.float32, -bound, bound)
        return w_t, b

    params = {
        "q":   init_linear(keys[0], keys[1], d_model, d_model),
        "k":   init_linear(keys[2], keys[3], d_model, d_model),
        "v":   init_linear(keys[4], keys[5], d_model, d_model),
        "out": init_linear(keys[6], keys[7], d_model, d_model),
    }

    q = jax.random.normal(keys[8], (bs, seq, d_model), jnp.float32)
    k = jax.random.normal(keys[9], (bs, seq, d_model), jnp.float32)
    v = jax.random.normal(keys[10], (bs, seq, d_model), jnp.float32)

    out = prob_sparse_attention(params, q, k, v, n_heads, topk_factor=0.5)
    out = jax.block_until_ready(out)

    ref = reference(params, q, k, v, n_heads, topk_factor=0.5)
    assert out.shape == (bs, seq, d_model)
    assert jnp.allclose(out, ref, atol=1e-3, rtol=1e-3)
    print("KERNEL_OK")
</pallas_src>

<mosaic_0001>
module attributes {stable_mosaic.version = 11 : i64} {
  func.func @_linear_kernel(%arg0: i32, %arg1: i32, %arg2: memref<1x8x32xf32, #tpu.memory_space<vmem>>, %arg3: memref<32x32xf32, #tpu.memory_space<vmem>>, %arg4: memref<1x32xf32, #tpu.memory_space<vmem>>, %arg5: memref<1x8x32xf32, #tpu.memory_space<vmem>>) attributes {dimension_semantics = [#tpu.dimension_semantics<parallel>, #tpu.dimension_semantics<parallel>], iteration_bounds = array<i64: 2, 1>, scalar_prefetch = 0 : i64, scratch_operands = 0 : i64, tpu.core_type = #tpu.core_type<tc>, window_params = [{transform_indices = @transform_0, window_bounds = array<i64: 1, 8, 32>}, {pipeline_mode = #tpu.pipeline_mode<synchronous>, transform_indices = @transform_1, window_bounds = array<i64: 32, 32>}, {pipeline_mode = #tpu.pipeline_mode<synchronous>, transform_indices = @transform_2, window_bounds = array<i64: 1, 32>}, {transform_indices = @transform_3, window_bounds = array<i64: 1, 8, 32>}]} {
    %c0 = arith.constant 0 : index
    %c0_0 = arith.constant 0 : index
    %c0_1 = arith.constant 0 : index
    %0 = vector.load %arg2[%c0, %c0_0, %c0_1] : memref<1x8x32xf32, #tpu.memory_space<vmem>>, vector<1x8x32xf32>
    %1 = vector.shape_cast %0 : vector<1x8x32xf32> to vector<8x32xf32>
    %c0_2 = arith.constant 0 : index
    %c0_3 = arith.constant 0 : index
    %2 = vector.load %arg3[%c0_2, %c0_3] : memref<32x32xf32, #tpu.memory_space<vmem>>, vector<32x32xf32>
    %cst = arith.constant dense<0.000000e+00> : vector<8x32xf32>
    %3 = tpu.matmul %1, %2, %cst {dimension_numbers = #tpu.dot_dimension_numbers<[1], [0], [0], [1], [0, 0, 1, 1], [], []>} : vector<8x32xf32>, vector<32x32xf32>, vector<8x32xf32> -> vector<8x32xf32>
    %c0_4 = arith.constant 0 : index
    %c0_5 = arith.constant 0 : index
    %4 = vector.load %arg4[%c0_4, %c0_5] : memref<1x32xf32, #tpu.memory_space<vmem>>, vector<1x32xf32>
    %5 = vector.broadcast %4 : vector<1x32xf32> to vector<8x32xf32>
    %6 = arith.addf %3, %5 : vector<8x32xf32>
    %c0_6 = arith.constant 0 : index
    %c0_7 = arith.constant 0 : index
    %c0_8 = arith.constant 0 : index
    %7 = vector.load %arg5[%c0_6, %c0_7, %c0_8] : memref<1x8x32xf32, #tpu.memory_space<vmem>>, vector<1x8x32xf32>
    %8 = vector.shape_cast %7 : vector<1x8x32xf32> to vector<8x32xf32>
    %9 = vector.shape_cast %6 : vector<8x32xf32> to vector<1x8x32xf32>
    tpu.vector_store %arg5[%c0_6, %c0_7, %c0_8], %9 {strides = array<i32>} : memref<1x8x32xf32, #tpu.memory_space<vmem>>, vector<1x8x32xf32>,
    return
  }
  func.func @transform_0(%arg0: i32, %arg1: i32) -> (i32, i32, i32) {
    %c0_i32 = arith.constant 0 : i32
    %c0_i32_0 = arith.constant 0 : i32
    return %arg0, %arg1, %c0_i32 : i32, i32, i32
  }
  func.func @transform_1(%arg0: i32, %arg1: i32) -> (i32, i32) {
    %c0_i32 = arith.constant 0 : i32
    %c0_i32_0 = arith.constant 0 : i32
    %c0_i32_1 = arith.constant 0 : i32
    return %c0_i32, %c0_i32_0 : i32, i32
  }
  func.func @transform_2(%arg0: i32, %arg1: i32) -> (i32, i32) {
    %c0_i32 = arith.constant 0 : i32
    %c0_i32_0 = arith.constant 0 : i32
    %c0_i32_1 = arith.constant 0 : i32
    return %c0_i32, %c0_i32_0 : i32, i32
  }
  func.func @transform_3(%arg0: i32, %arg1: i32) -> (i32, i32, i32) {
    %c0_i32 = arith.constant 0 : i32
    %c0_i32_0 = arith.constant 0 : i32
    return %arg0, %arg1, %c0_i32 : i32, i32, i32
  }
}

</mosaic_0001>

<llo_original>
// kernel: tpu_custom_call.1
$region0: #{tpu_custom_call.1}
  #allocation0 [shape = 'u32[]', space=smem, size = 0x4, offset = 0x4, fixed_abs, tag = 'smem constant byte address 0x4 - core index']
  #allocation1 [shape = 'u32[144,128]{1,0:T(1,128)}', space=vmem, size = 0x12000, scoped, tag = 'internal scratch']
  %s0 = inlined_call_operand.hbm [shape: f32[2,8,32], index: 0, kind: input, shape index: {}]
  %s1 = inlined_call_operand.hbm [shape: f32[32,32], index: 1, kind: input, shape index: {}]
  %s2 = inlined_call_operand.vmem [shape: f32[1,32], index: 2, kind: input, shape index: {}]
  %s3 = inlined_call_operand.hbm [shape: f32[2,8,32], index: 3, kind: output, shape index: {}]
  %s4 = sld [smem:[#allocation0]]
  $region53: #{tpu_custom_call.1} parent=0
    _
  %s6 = ssub.s32 1, %s4
  %s7 = scalar_select 0, %s6, %s4
  $region1: #{tpu_custom_call.1} parent=0
    #allocation2 [shape = 'u8[8192]{0}', space=vmem, size = 0x2000, scoped, tag = 'input window, operand 0']
    #allocation3 [shape = 's32[2]{0}', space=sflag, size = 0x8, scoped, tag = 'scoped memory for tpu_custom_call.1']
    #allocation4 [shape = 's32[2]{0}', space=sflag, size = 0x8, scoped, tag = 'scoped memory for tpu_custom_call.1']
    #allocation5 [shape = 'u8[16384]{0}', space=vmem, size = 0x4000, scoped, tag = 'input window, operand 1, single buffered']
    #allocation6 [shape = 's32[1]{0}', space=sflag, size = 0x4, scoped, tag = 'scoped memory for tpu_custom_call.1']
    #allocation7 [shape = 'u8[8192]{0}', space=vmem, size = 0x2000, scoped, tag = 'output window, operand 0']
    %8 = vsyncpa [#allocation3], 0
    %s9 = scalar_lea.sflag [#allocation3], 1
    %10 = vsyncpa %s9, 0
    %11 = vsyncpa [#allocation6], 0
    %12 = vsyncpa [#allocation4], 0
    %s13 = scalar_lea.sflag [#allocation4], 1
    %14 = vsyncpa %s13, 0
    loop: start=0, step=1, limit=4
    $region2: #{tpu_custom_call.1} parent=1 // loop_pre_header
      _
    $region3: #{tpu_custom_call.1} parent=1 // loop_header
      %s16 = sphi 0, %s20
      %p17 = scmp.ge.s32.totalorder %s16, 4
      %s23 = sphi 0, %s35
      %s24 = sphi 0, %s31
      %s25 = sphi 0, %s23
      %s26 = sphi 0, %s24
      %s27 = sphi 0, %s25
      %s28 = sphi 0, %s26
      %s40 = sphi 0, %s42
      %s43 = sphi 0, %s40
      %s44 = sphi 0, %s43
      %s60 = sphi 0, %s44
      %s64 = sphi 0, %s64
      %s66 = sphi 0, %s64
      %s67 = sphi 0, %s66
      %s81 = sphi 0, %s67
      %s85 = sphi 0, %s85
      %s87 = sphi 0, %s85
      %s88 = sphi 0, %s87
      %s102 = sphi 0, %s88
      %s110 = sphi 0, %s112
      %s113 = sphi 0, %s110
      %s114 = sphi 0, %s113
      %s130 = sphi 0, %s114
    $region4: #{tpu_custom_call.1} parent=1 // loop_header_branch
      %19 = sbr.rel (%p17) target = $region8
    $region5: #{tpu_custom_call.1} parent=1 // loop_body
      %s21 = ssub.s32 %s16, 1
      %s22 = ssub.s32 %s16, 2
      %s29 = sadd.s32 1, %s24
      %p30 = scmp.ge.s32.totalorder %s29, 1
      %s31 = scalar_select %p30, 0, %s29
      %s32 = sadd.s32 1, %s23
      %s33 = scalar_select %p30, %s32, %s23
      %p34 = scmp.ge.s32.totalorder %s33, 2
      %s35 = scalar_select %p34, 0, %s33
      %s36 = ssub.s32 %s23, %s35
      %s37 = ssub.s32 %s24, %s31
      %s38 = sor.u32 %s36, %s37
      %p39 = scmp.eq.s32.totalorder %s38, 0
      %s41 = sadd.s32 %s40, 1
      %s42 = scalar_select %p39, %s40, %s41
      %p45 = pneg %p39
      %p46 = scmp.eq.s32.totalorder %s16, 1
      %p47 = por %p45, %p46
      %p48 = scmp.ne.s32.totalorder %s40, %s43
      %p49 = scmp.eq.s32.totalorder %s16, 0
      %p50 = por %p48, %p49
      %p51 = scmp.ne.s32.totalorder %s40, %s43
      %p52 = scmp.eq.s32.totalorder %s21, 1
      %p53 = por %p51, %p52
      %p54 = scmp.ne.s32.totalorder %s43, %s44
      %p55 = scmp.eq.s32.totalorder %s21, 0
      %p56 = por %p54, %p55
      %p57 = scmp.ne.s32.totalorder %s43, %s44
      %p58 = scmp.eq.s32.totalorder %s22, 1
      %p59 = por %p57, %p58
      %p61 = scmp.ne.s32.totalorder %s44, %s60
      %p62 = scmp.eq.s32.totalorder %s22, 0
      %p63 = por %p61, %p62
      %s65 = sadd.s32 %s64, 1
      %p68 = scmp.eq.s32.totalorder %s16, 1
      %p69 = scmp.ne.s32.totalorder %s64, %s66
      %p70 = scmp.eq.s32.totalorder %s16, 0
      %p71 = por %p69, %p70
      %p72 = scmp.ne.s32.totalorder %s64, %s66
      %p73 = scmp.eq.s32.totalorder %s21, 1
      %p74 = por %p72, %p73
      %p75 = scmp.ne.s32.totalorder %s66, %s67
      %p76 = scmp.eq.s32.totalorder %s21, 0
      %p77 = por %p75, %p76
      %p78 = scmp.ne.s32.totalorder %s66, %s67
      %p79 = scmp.eq.s32.totalorder %s22, 1
      %p80 = por %p78, %p79
      %p82 = scmp.ne.s32.totalorder %s67, %s81
      %p83 = scmp.eq.s32.totalorder %s22, 0
      %p84 = por %p82, %p83
      %s86 = sadd.s32 %s85, 1
      %p89 = scmp.eq.s32.totalorder %s16, 1
      %p90 = scmp.ne.s32.totalorder %s85, %s87
      %p91 = scmp.eq.s32.totalorder %s16, 0
      %p92 = por %p90, %p91
      %p93 = scmp.ne.s32.totalorder %s85, %s87
      %p94 = scmp.eq.s32.totalorder %s21, 1
      %p95 = por %p93, %p94
      %p96 = scmp.ne.s32.totalorder %s87, %s88
      %p97 = scmp.eq.s32.totalorder %s21, 0
      %p98 = por %p96, %p97
      %p99 = scmp.ne.s32.totalorder %s87, %s88
      %p100 = scmp.eq.s32.totalorder %s22, 1
      %p101 = por %p99, %p100
      %p103 = scmp.ne.s32.totalorder %s88, %s102
      %p104 = scmp.eq.s32.totalorder %s22, 0
      %p105 = por %p103, %p104
      %s106 = ssub.s32 %s23, %s35
      %s107 = ssub.s32 %s24, %s31
      %s108 = sor.u32 %s106, %s107
      %p109 = scmp.eq.s32.totalorder %s108, 0
      %s111 = sadd.s32 %s110, 1
      %s112 = scalar_select %p109, %s110, %s111
      %p115 = pneg %p109
      %p116 = scmp.eq.s32.totalorder %s16, 1
      %p117 = por %p115, %p116
      %p118 = scmp.ne.s32.totalorder %s110, %s113
      %p119 = scmp.eq.s32.totalorder %s16, 0
      %p120 = por %p118, %p119
      %p121 = scmp.ne.s32.totalorder %s110, %s113
      %p122 = scmp.eq.s32.totalorder %s21, 1
      %p123 = por %p121, %p122
      %p124 = scmp.ne.s32.totalorder %s113, %s114
      %p125 = scmp.eq.s32.totalorder %s21, 0
      %p126 = por %p124, %p125
      %p127 = scmp.ne.s32.totalorder %s113, %s114
      %p128 = scmp.eq.s32.totalorder %s22, 1
      %p129 = por %p127, %p128
      %p131 = scmp.ne.s32.totalorder %s114, %s130
      %p132 = scmp.eq.s32.totalorder %s22, 0
      %p133 = por %p131, %p132
      %p134 = scmp.le.s32.totalorder 1, %s16
      %p135 = scmp.lt.s32.totalorder %s16, 3
      %p136 = pnand %p134, %p135
      %p137 = pneg %p136
      // Predicated region
      $region9: #{tpu_custom_call.1} parent=5 // pred_check
        _
      $region10: #{tpu_custom_call.1} parent=5 // pred_check_branch
        %139 = sbr.rel (%p136) target = $region12
      $region11: #{tpu_custom_call.1} parent=5 // pred_region
        %s140 = ssub.s32 %s16, 1
        // Predicated region
        $region13: #{tpu_custom_call.1} parent=11 // pred_check
          %p141 = pneg %p77
        $region14: #{tpu_custom_call.1} parent=11 // pred_check_branch
          %143 = sbr.rel (%p141) target = $region16
        $region15: #{tpu_custom_call.1} parent=11 // pred_region
          %s145 = ssub.s32 512, 512
          %146 = vsyncadd [#allocation6], %s145
          %s147 = sshll.u32 [#allocation5], 4
          %s148 = int_to_ptr.vmem [resolvable:$true] %s147
          %153 = dma.hbm_to_vmem [thread:$0]  %s1, 512, %s148, [#allocation6], 128, 128, 8
        $region16: #{tpu_custom_call.1} parent=11 // pred_fallthru
          _
        // Predicated region
        $region17: #{tpu_custom_call.1} parent=11 // pred_check
          %p154 = pneg %p98
        $region18: #{tpu_custom_call.1} parent=11 // pred_check_branch
          %156 = sbr.rel (%p154) target = $region20
        $region19: #{tpu_custom_call.1} parent=11 // pred_region
          _
        $region20: #{tpu_custom_call.1} parent=11 // pred_fallthru
          _
      $region12: #{tpu_custom_call.1} parent=5 // pred_fallthru
        _
      %p157 = scmp.lt.s32.totalorder %s16, 2
      // Predicated region
      $region21: #{tpu_custom_call.1} parent=5 // pred_check
        %p158 = pneg %p157
      $region22: #{tpu_custom_call.1} parent=5 // pred_check_branch
        %160 = sbr.rel (%p158) target = $region24
      $region23: #{tpu_custom_call.1} parent=5 // pred_region
        // Predicated region
        $region25: #{tpu_custom_call.1} parent=23 // pred_check
          %p161 = pneg %p50
        $region26: #{tpu_custom_call.1} parent=23 // pred_check_branch
          %163 = sbr.rel (%p161) target = $region28
        $region27: #{tpu_custom_call.1} parent=23 // pred_region
          %s164 = sand.u32 %s40, 1
          %s165 = scalar_lea.sflag [#allocation3], %s164
          %s166 = sand.u32 %s40, 1
          %s167 = smul.addr %s166, 8
          %s168 = scalar_lea.vmem [#allocation2], %s167
          %s170 = ssub.s32 128, 128
          %171 = vsyncadd %s165, %s170
          %s172 = sadd.s32 %s24, %s23
          %s173 = smul.addr %s172, 128
          %s174 = scalar_lea.hbm %s0, %s173
          %s176 = sshll.u32 %s168, 4
          %s177 = int_to_ptr.vmem [resolvable:$true] %s176
          %179 = dma.hbm_to_vmem [thread:$0]  %s174, 128, %s177, %s165
        $region28: #{tpu_custom_call.1} parent=23 // pred_fallthru
          _
      $region24: #{tpu_custom_call.1} parent=5 // pred_fallthru
        _
      %p180 = scmp.le.s32.totalorder 1, %s16
      %p181 = scmp.lt.s32.totalorder %s16, 3
      %p182 = pnand %p180, %p181
      %p183 = pneg %p182
      // Predicated region
      $region29: #{tpu_custom_call.1} parent=5 // pred_check
        _
      $region30: #{tpu_custom_call.1} parent=5 // pred_check_branch
        %185 = sbr.rel (%p182) target = $region32
      $region31: #{tpu_custom_call.1} parent=5 // pred_region
        %s186 = ssub.s32 %s16, 1
        %s187 = sand.u32 %s43, 1
        %s188 = scalar_lea.sflag [#allocation3], %s187
        %s189 = sand.u32 %s43, 1
        %s190 = smul.addr %s189, 8
        %s191 = scalar_lea.vmem [#allocation2], %s190
        // Predicated region
        $region33: #{tpu_custom_call.1} parent=31 // pred_check
          %p192 = pneg %p56
        $region34: #{tpu_custom_call.1} parent=31 // pred_check_branch
          %194 = sbr.rel (%p192) target = $region36
        $region35: #{tpu_custom_call.1} parent=31 // pred_region
          %195 = dma.done %s188, 128
        $region36: #{tpu_custom_call.1} parent=31 // pred_fallthru
          _
        // Predicated region
        $region37: #{tpu_custom_call.1} parent=31 // pred_check
          %p196 = pneg %p77
        $region38: #{tpu_custom_call.1} parent=31 // pred_check_branch
          %198 = sbr.rel (%p196) target = $region40
        $region39: #{tpu_custom_call.1} parent=31 // pred_region
          %199 = dma.done [#allocation6], 512
        $region40: #{tpu_custom_call.1} parent=31 // pred_fallthru
          _
        %s200 = sand.u32 %s43, 1
        %s201 = scalar_lea.sflag [#allocation3], %s200
        %s202 = sand.u32 %s43, 1
        %s203 = smul.addr %s202, 8
        %s204 = scalar_lea.vmem [#allocation2], %s203
        %p205 = pneg %p56
        %p206 = pneg %p53
        %p207 = pneg %p77
        %p208 = pneg %p74
        %p209 = pneg %p98
        %p210 = pneg %p95
        %p211 = pneg %p126
        %p212 = pneg %p123
        %s213 = sand.u32 %s113, 1
        %s214 = scalar_lea.sflag [#allocation4], %s213
        %s215 = sand.u32 %s113, 1
        %s216 = smul.addr %s215, 8
        %s217 = scalar_lea.vmem [#allocation7], %s216
        %v218 = vld [vmem:[%s191] sm:$0xff]
        %v219 = vld [vmem:[#allocation5] sm:$0xff]
        %v220 = vld [vmem:[#allocation5 + $0x8] sm:$0xff]
        %v221 = vld [vmem:[#allocation5 + $0x10] sm:$0xff]
        %v222 = vld [vmem:[#allocation5 + $0x18] sm:$0xff]
        %v223 = vld [vmem:[%s2] sm:$0x1]
        %v225 = vlaneseq
        %v226 = vshrl.u32 %v225, 7
        %v227 = vsub.s32 0, %v226
        %v228 = vrot.slane %v223, %v227
        %vm230 = vcmask 261120
        %v232 = vsel %vm230, %v218, 0
        %234 = vmatprep.subr.mxu0 0.0
        %235 = vmatpush1.msra.mxu0 %v219
        %236 = vmatprep.subr.mxu0 0.0
        %237 = vmatpush1.msra.mxu0 %v220
        %238 = vmatprep.subr.mxu0 0.0
        %239 = vmatpush1.msra.mxu0 %v221
        %240 = vmatprep.subr.mxu0 0.0
        %241 = vmatpush1.msra.mxu0 %v222
        %242 = vmatprep.subr.mxu0 0.0
        %243 = vmatpush1.msra.mxu0 0.0
        %244 = vmatprep.subr.mxu0 0.0
        %245 = vmatpush1.msra.mxu0 0.0
        %246 = vmatprep.subr.mxu0 0.0
        %247 = vmatpush1.msra.mxu0 0.0
        %248 = vmatprep.subr.mxu0 0.0
        %249 = vmatpush1.msra.mxu0 0.0
        %250 = vmatprep.subr.mxu0 0.0
        %251 = vmatpush1.msra.mxu0 0.0
        %252 = vmatprep.subr.mxu0 0.0
        %253 = vmatpush1.msra.mxu0 0.0
        %254 = vmatprep.subr.mxu0 0.0
        %255 = vmatpush1.msra.mxu0 0.0
        %256 = vmatprep.subr.mxu0 0.0
        %257 = vmatpush1.msra.mxu0 0.0
        %258 = vmatprep.subr.mxu0 0.0
        %259 = vmatpush1.msra.mxu0 0.0
        %260 = vmatprep.subr.mxu0 0.0
        %261 = vmatpush1.msra.mxu0 0.0
        %262 = vmatprep.subr.mxu0 0.0
        %263 = vmatpush1.msra.mxu0 0.0
        %264 = vmatprep.subr.mxu0 0.0
        %265 = vmatpush1.msra.mxu0 0.0
        %266 = vmatprep.subr.mxu0 0.0
        %267 = vmatpush1.msra.mxu0 0.0
        %268 = vmatprep.subr.mxu0 0.0
        %269 = vmatpush1.msra.mxu0 0.0
        %270 = vmatprep.subr.mxu0 0.0
        %271 = vmatpush1.msra.mxu0 0.0
        %272 = vmatprep.subr.mxu0 0.0
        %273 = vmatpush1.msra.mxu0 0.0
        %274 = vmatprep.subr.mxu0 0.0
        %275 = vmatpush1.msra.mxu0 0.0
        %276 = vmatprep.subr.mxu0 0.0
        %277 = vmatpush1.msra.mxu0 0.0
        %278 = vmatprep.subr.mxu0 0.0
        %279 = vmatpush1.msra.mxu0 0.0
        %280 = vmatprep.subr.mxu0 0.0
        %281 = vmatpush1.msra.mxu0 0.0
        %282 = vmatprep.subr.mxu0 0.0
        %283 = vmatpush1.msra.mxu0 0.0
        %284 = vmatprep.subr.mxu0 0.0
        %285 = vmatpush1.msra.mxu0 0.0
        %286 = vmatprep.subr.mxu0 0.0
        %287 = vmatpush1.msra.mxu0 0.0
        %288 = vmatprep.subr.mxu0 0.0
        %289 = vmatpush1.msra.mxu0 0.0
        %290 = vmatprep.subr.mxu0 0.0
        %291 = vmatpush1.msra.mxu0 0.0
        %292 = vmatprep.subr.mxu0 0.0
        %293 = vmatpush1.msra.mxu0 0.0
        %294 = vmatprep.subr.mxu0 0.0
        %295 = vmatpush1.msra.mxu0 0.0
        %296 = vmatprep.subr.mxu0 0.0
        %297 = vmatpush1.msra.mxu0 0.0
        %298 = vmatprep.mubr.f32.mxu0 0.0
        %299 = vmatmul.mubr.f32.gmra.mrb[0].mxu0 %v232
        %v300 = vpop.f32.mrb[0].mxu0
        %v301 = vadd.f32 %v228, %v300
        %v302 = vpop.f32.mrb[0].mxu0
        %303 = vdwg.mxu0
        %304 = vst.msk [vmem:[%s217] sm:$0xff] %vm230, %v301
        %s305 = sand.u32 %s113, 1
        %s306 = scalar_lea.sflag [#allocation4], %s305
        %s307 = sand.u32 %s113, 1
        %s308 = smul.addr %s307, 8
        %s309 = scalar_lea.vmem [#allocation7], %s308
        // Predicated region
        $region41: #{tpu_custom_call.1} parent=31 // pred_check
          %p310 = pneg %p123
        $region42: #{tpu_custom_call.1} parent=31 // pred_check_branch
          %312 = sbr.rel (%p310) target = $region44
        $region43: #{tpu_custom_call.1} parent=31 // pred_region
          %s314 = ssub.s32 128, 128
          %315 = vsyncadd %s306, %s314
          %s316 = sadd.s32 %s26, %s25
          %s317 = smul.addr %s316, 128
          %s318 = scalar_lea.hbm %s3, %s317
          %s320 = sshll.u32 %s309, 4
          %s321 = int_to_ptr.vmem [resolvable:$true] %s320
          %323 = dma.vmem_to_hbm [thread:$0]  %s321, 128, %s318, %s306
        $region44: #{tpu_custom_call.1} parent=31 // pred_fallthru
          _
      $region32: #{tpu_custom_call.1} parent=5 // pred_fallthru
        _
      %p324 = scmp.le.s32.totalorder 2, %s16
      // Predicated region
      $region45: #{tpu_custom_call.1} parent=5 // pred_check
        %p325 = pneg %p324
      $region46: #{tpu_custom_call.1} parent=5 // pred_check_branch
        %327 = sbr.rel (%p325) target = $region48
      $region47: #{tpu_custom_call.1} parent=5 // pred_region
        %s328 = ssub.s32 %s16, 2
        // Predicated region
        $region49: #{tpu_custom_call.1} parent=47 // pred_check
          %p329 = pneg %p129
        $region50: #{tpu_custom_call.1} parent=47 // pred_check_branch
          %331 = sbr.rel (%p329) target = $region52
        $region51: #{tpu_custom_call.1} parent=47 // pred_region
          %s332 = sand.u32 %s114, 1
          %s333 = scalar_lea.sflag [#allocation4], %s332
          %s334 = sand.u32 %s114, 1
          %s335 = smul.addr %s334, 8
          %s336 = scalar_lea.vmem [#allocation7], %s335
          %337 = dma.done %s333, 128
        $region52: #{tpu_custom_call.1} parent=47 // pred_fallthru
          _
      $region48: #{tpu_custom_call.1} parent=5 // pred_fallthru
        _
    $region6: #{tpu_custom_call.1} parent=1 // loop_footer
      %s20 = sadd.s32 1, %s16
    $region7: #{tpu_custom_call.1} parent=1 // loop_footer_branch
      %15 = sbr.rel target = $region3
    $region8: #{tpu_custom_call.1} parent=1 // loop_exit
      _
    %338 = vsyncpa [#allocation3], 1
    %s339 = scalar_lea.sflag [#allocation3], 1
    %340 = vsyncpa %s339, 1
    %341 = vsyncpa [#allocation6], 1
    %342 = vsyncpa [#allocation4], 1
    %s343 = scalar_lea.sflag [#allocation4], 1
    %344 = vsyncpa %s343, 1

</llo_original>
